<compile_context>
chip_gen: v7x
topology: tpu7x:2x2x1
jax: 0.10.0
libtpu: 0.0.40
codegen_flags: <defaults>
</compile_context>

<pallas_src>
import functools

import jax
import jax.numpy as jnp
from jax import lax
from jax.experimental import pallas as pl
from jax.experimental.pallas import tpu as pltpu


_MAX_TILE_S = 1024        # diminishing returns past ~512-1024 rows
_F32_TEMPS = 6            # live f32 temporaries per row inside the kernel
_VMEM_CAP_FRAC = 0.85     # never declare more than this fraction of VMEM
_TILE_BUDGET_FRAC = 0.75  # fraction of the declared limit spent on the tile


def _tpu_info():
    """(physical VMEM bytes per TensorCore, has_two_tensorcores)."""
    cap = None
    try:
        cap = getattr(pltpu.get_tpu_info(), "vmem_capacity_bytes", None)
    except Exception:
        cap = None
    if not cap:
        cap = 64 << 20  # conservative (v7x) fallback
    # v7x has 2 TensorCores/chip and 64 MiB VMEM per TC; v5e/v6e have 1 TC and
    # 128 MiB.  VMEM capacity is a robust proxy for the core count.
    two_cores = int(cap) <= (64 << 20)
    return int(cap), two_cores


def _row_align(dtype_bytes):
    # Sublane packing: 8 rows for 4-byte, 16 for 2-byte, 32 for 1-byte dtypes.
    return max(8, 32 // dtype_bytes)


def _pick_tile_s(S, H, dtype_bytes, num_row_streams, vmem_cap, two_cores):
    """Largest row tile whose double-buffered working set fits the VMEM budget."""
    align = _row_align(dtype_bytes)
    # Per-row VMEM cost: double-buffered I/O streams + live f32 temporaries.
    per_row = num_row_streams * 2 * dtype_bytes * H + _F32_TEMPS * 4 * H
    budget = int(vmem_cap * _VMEM_CAP_FRAC * _TILE_BUDGET_FRAC)
    tile = max(align, (budget // per_row) // align * align)
    tile = min(tile, _MAX_TILE_S)
    # Keep the pipeline (and both TensorCores on v7x) fed when S is big enough.
    min_steps = 8 if two_cores else 4
    steps_cap = pl.cdiv(pl.cdiv(S, min_steps), align) * align
    tile = min(tile, max(steps_cap, align))
    # Never exceed (sublane-aligned) S.
    tile = min(tile, pl.cdiv(S, align) * align)
    if two_cores:
        # Prefer an even step count so both TensorCores get equal work.
        steps = pl.cdiv(S, tile)
        if steps > 1 and steps % 2 == 1:
            tile = max(align, pl.cdiv(pl.cdiv(S, steps + 1), align) * align)
    return int(tile)


def _vmem_limit_bytes(tile_s, H, dtype_bytes, num_row_streams, vmem_cap):
    need = num_row_streams * 2 * tile_s * H * dtype_bytes   # double-buffered I/O
    need += _F32_TEMPS * tile_s * H * 4                     # in-kernel f32 temps
    need += 16 * H * 4                                      # weight / bias rows
    need += 1 << 20                                         # internal scratch slack
    cap = int(vmem_cap * _VMEM_CAP_FRAC)
    return int(min(cap, max(need, 32 << 20)))


def _flash_rw_ln2_kernel(h_ref, r_ref, wa_ref, ba_ref, wm_ref, bm_ref,
                         ln_attn_ref, ln_mlp_ref, res_ref, *, eps, inv_h):
    # Residual add in f32; this sum IS the new residual.
    x = h_ref[...].astype(jnp.float32) + r_ref[...].astype(jnp.float32)
    res_ref[...] = x.astype(res_ref.dtype)

    # Two-pass (shifted) LayerNorm statistics over the hidden (lane) axis:
    # numerically safer than E[x^2]-mean^2 and the subtract is needed for
    # xhat anyway (kernel is HBM-bound, the compute is free filler).
    mean = jnp.sum(x, axis=-1, keepdims=True) * inv_h
    xc = x - mean
    var = jnp.sum(xc * xc, axis=-1, keepdims=True) * inv_h
    xhat = xc * lax.rsqrt(var + eps)

    wa = wa_ref[...].astype(jnp.float32)   # (1, H) broadcasts over rows
    ba = ba_ref[...].astype(jnp.float32)
    wm = wm_ref[...].astype(jnp.float32)
    bm = bm_ref[...].astype(jnp.float32)
    ln_attn_ref[...] = (xhat * wa + ba).astype(ln_attn_ref.dtype)
    ln_mlp_ref[...] = (xhat * wm + bm).astype(ln_mlp_ref.dtype)


def _flash_rw_ln1_kernel(h_ref, r_ref, w_ref, b_ref, ln_ref, res_ref,
                         *, eps, inv_h):
    x = h_ref[...].astype(jnp.float32) + r_ref[...].astype(jnp.float32)
    res_ref[...] = x.astype(res_ref.dtype)

    mean = jnp.sum(x, axis=-1, keepdims=True) * inv_h
    xc = x - mean
    var = jnp.sum(xc * xc, axis=-1, keepdims=True) * inv_h
    xhat = xc * lax.rsqrt(var + eps)

    w = w_ref[...].astype(jnp.float32)
    b = b_ref[...].astype(jnp.float32)
    ln_ref[...] = (xhat * w + b).astype(ln_ref.dtype)


def flash_rw_layer_norm(hidden_states, residual, w_attn, b_attn,
                        w_mlp=None, b_mlp=None, *, eps=1e-5, tile_s=None):
    """Fused FlashRWLayerNorm forward.

    num_ln == 2: pass distinct (w_attn, b_attn) and (w_mlp, b_mlp).
    num_ln == 1: pass w_mlp=b_mlp=None; the fast path writes only one LN
                 output stream and returns it twice (matching the module).

    Args:
      hidden_states, residual: [S, H]
      w_*, b_*: [H]
    Returns:
      (ln_attn, ln_mlp, residual_out), each [S, H].
    """
    S, H = hidden_states.shape
    dtype = hidden_states.dtype
    dtype_bytes = jnp.dtype(dtype).itemsize
    single_ln = w_mlp is None
    if single_ln:
        assert b_mlp is None, "num_ln==1 path takes no MLP bias"
    # HBM row streams: inputs (h, r) + outputs (res, ln[, ln_mlp]).
    num_row_streams = 4 if single_ln else 5

    vmem_cap, two_cores = _tpu_info()
    if tile_s is None:
        tile_s = _pick_tile_s(S, H, dtype_bytes, num_row_streams,
                              vmem_cap, two_cores)
    align = _row_align(dtype_bytes)
    assert tile_s % align == 0, "tile_s must respect sublane packing"

    # Ragged S: size the grid with cdiv and let Pallas mask the ragged last
    # block.  Per-row LN means the padded garbage rows are never consumed and
    # the masked store discards them -- no wrapper-side pad/slice HBM traffic.
    grid_s = pl.cdiv(S, tile_s)

    row_spec = pl.BlockSpec((tile_s, H), lambda i: (i, 0))
    # Constant index_map -> block index never changes across grid steps, so the
    # pipeline keeps these (1, H) rows resident instead of re-DMA'ing them.
    vec_spec = pl.BlockSpec((1, H), lambda i: (0, 0))

    compiler_params = pltpu.CompilerParams(
        dimension_semantics=("parallel",),
        vmem_limit_bytes=_vmem_limit_bytes(
            tile_s, H, dtype_bytes, num_row_streams, vmem_cap),
    )

    if single_ln:
        kernel = functools.partial(_flash_rw_ln1_kernel, eps=eps, inv_h=1.0 / H)
        ln, res_out = pl.pallas_call(
            kernel,
            out_shape=(jax.ShapeDtypeStruct((S, H), dtype),
                       jax.ShapeDtypeStruct((S, H), dtype)),
            grid_spec=pltpu.PrefetchScalarGridSpec(
                num_scalar_prefetch=0,
                grid=(grid_s,),
                in_specs=[row_spec, row_spec, vec_spec, vec_spec],
                out_specs=[row_spec, row_spec],
            ),
            compiler_params=compiler_params,
        )(hidden_states, residual, w_attn.reshape(1, H), b_attn.reshape(1, H))
        return ln, ln, res_out

    kernel = functools.partial(_flash_rw_ln2_kernel, eps=eps, inv_h=1.0 / H)
    ln_attn, ln_mlp, res_out = pl.pallas_call(
        kernel,
        out_shape=(jax.ShapeDtypeStruct((S, H), dtype),) * 3,
        grid_spec=pltpu.PrefetchScalarGridSpec(
            num_scalar_prefetch=0,
            grid=(grid_s,),
            in_specs=[row_spec, row_spec, vec_spec, vec_spec, vec_spec, vec_spec],
            out_specs=[row_spec, row_spec, row_spec],
        ),
        compiler_params=compiler_params,
    )(hidden_states, residual, w_attn.reshape(1, H), b_attn.reshape(1, H),
      w_mlp.reshape(1, H), b_mlp.reshape(1, H))
    return ln_attn, ln_mlp, res_out


def _reference(hidden_states, residual, w_attn, b_attn, w_mlp, b_mlp, eps):
    x = (hidden_states + residual).astype(jnp.float32)
    mean = jnp.mean(x, -1, keepdims=True)
    var = jnp.mean((x - mean) ** 2, -1, keepdims=True)
    xhat = (x - mean) * lax.rsqrt(var + eps)
    ln_attn = xhat * w_attn + b_attn
    ln_mlp = xhat * w_mlp + b_mlp
    return (ln_attn.astype(hidden_states.dtype),
            ln_mlp.astype(hidden_states.dtype),
            x.astype(hidden_states.dtype))


if __name__ == "__main__":
    key = jax.random.PRNGKey(0)
    # Small demo: H lane-dense (multiple of 128); S deliberately NOT a multiple
    # of the row alignment so the ragged (masked) last-block path is exercised.
    S, H = 20, 128
    eps = 1e-5

    k1, k2, k3, k4, k5, k6 = jax.random.split(key, 6)
    hidden_states = jax.random.normal(k1, (S, H), dtype=jnp.float32)
    residual = jax.random.normal(k2, (S, H), dtype=jnp.float32)
    w_attn = 1.0 + 0.02 * jax.random.normal(k3, (H,), dtype=jnp.float32)
    b_attn = 0.01 * jax.random.normal(k4, (H,), dtype=jnp.float32)
    w_mlp = 1.0 + 0.02 * jax.random.normal(k5, (H,), dtype=jnp.float32)
    b_mlp = 0.01 * jax.random.normal(k6, (H,), dtype=jnp.float32)

    # num_ln == 2 path (two independent LayerNorms over hidden + residual).
    ln_attn, ln_mlp, res_out = flash_rw_layer_norm(
        hidden_states, residual, w_attn, b_attn, w_mlp, b_mlp, eps=eps)
    # num_ln == 1 fast path (single LN output stream, returned twice).
    ln_h0, ln_h1, res_out1 = flash_rw_layer_norm(
        hidden_states, residual, w_attn, b_attn, eps=eps)
    jax.block_until_ready((ln_attn, ln_mlp, res_out, ln_h0, ln_h1, res_out1))

    # Correctness check against a pure-JAX reference.
    ref_attn, ref_mlp, ref_res = _reference(
        hidden_states, residual, w_attn, b_attn, w_mlp, b_mlp, eps)
    assert jnp.allclose(ln_attn, ref_attn, atol=2e-5, rtol=2e-5)
    assert jnp.allclose(ln_mlp, ref_mlp, atol=2e-5, rtol=2e-5)
    assert jnp.allclose(res_out, ref_res, atol=1e-6, rtol=1e-6)
    assert jnp.allclose(ln_h0, ref_attn, atol=2e-5, rtol=2e-5)
    assert jnp.allclose(ln_h1, ref_attn, atol=2e-5, rtol=2e-5)
    assert jnp.allclose(res_out1, ref_res, atol=1e-6, rtol=1e-6)

    print("KERNEL_OK")
</pallas_src>

<mosaic_0001>
module attributes {stable_mosaic.version = 11 : i64} {
  func.func @_flash_rw_ln2_kernel(%arg0: i32, %arg1: memref<8x128xf32, #tpu.memory_space<vmem>>, %arg2: memref<8x128xf32, #tpu.memory_space<vmem>>, %arg3: memref<1x128xf32, #tpu.memory_space<vmem>>, %arg4: memref<1x128xf32, #tpu.memory_space<vmem>>, %arg5: memref<1x128xf32, #tpu.memory_space<vmem>>, %arg6: memref<1x128xf32, #tpu.memory_space<vmem>>, %arg7: memref<8x128xf32, #tpu.memory_space<vmem>>, %arg8: memref<8x128xf32, #tpu.memory_space<vmem>>, %arg9: memref<8x128xf32, #tpu.memory_space<vmem>>) attributes {dimension_semantics = [#tpu.dimension_semantics<parallel>], iteration_bounds = array<i64: 3>, scalar_prefetch = 0 : i64, scratch_operands = 0 : i64, tpu.core_type = #tpu.core_type<tc>, window_params = [{transform_indices = @transform_0, window_bounds = array<i64: 8, 128>}, {transform_indices = @transform_1, window_bounds = array<i64: 8, 128>}, {pipeline_mode = #tpu.pipeline_mode<synchronous>, transform_indices = @transform_2, window_bounds = array<i64: 1, 128>}, {pipeline_mode = #tpu.pipeline_mode<synchronous>, transform_indices = @transform_3, window_bounds = array<i64: 1, 128>}, {pipeline_mode = #tpu.pipeline_mode<synchronous>, transform_indices = @transform_4, window_bounds = array<i64: 1, 128>}, {pipeline_mode = #tpu.pipeline_mode<synchronous>, transform_indices = @transform_5, window_bounds = array<i64: 1, 128>}, {transform_indices = @transform_6, window_bounds = array<i64: 8, 128>}, {transform_indices = @transform_7, window_bounds = array<i64: 8, 128>}, {transform_indices = @transform_8, window_bounds = array<i64: 8, 128>}]} {
    %c0 = arith.constant 0 : index
    %c0_0 = arith.constant 0 : index
    %0 = vector.load %arg1[%c0, %c0_0] : memref<8x128xf32, #tpu.memory_space<vmem>>, vector<8x128xf32>
    %c0_1 = arith.constant 0 : index
    %c0_2 = arith.constant 0 : index
    %1 = vector.load %arg2[%c0_1, %c0_2] : memref<8x128xf32, #tpu.memory_space<vmem>>, vector<8x128xf32>
    %2 = arith.addf %0, %1 : vector<8x128xf32>
    %c0_3 = arith.constant 0 : index
    %c0_4 = arith.constant 0 : index
    %3 = vector.load %arg9[%c0_3, %c0_4] : memref<8x128xf32, #tpu.memory_space<vmem>>, vector<8x128xf32>
    tpu.vector_store %arg9[%c0_3, %c0_4], %2 {strides = array<i32>} : memref<8x128xf32, #tpu.memory_space<vmem>>, vector<8x128xf32>,
    %cst = arith.constant dense<0.000000e+00> : vector<8xf32>
    %4 = vector.multi_reduction <add>, %2, %cst [1] : vector<8x128xf32> to vector<8xf32>
    %5 = vector.shape_cast %4 : vector<8xf32> to vector<8x1xf32>
    %cst_5 = arith.constant 7.812500e-03 : f32
    %6 = vector.broadcast %cst_5 : f32 to vector<8x1xf32>
    %7 = arith.mulf %5, %6 : vector<8x1xf32>
    %8 = vector.broadcast %7 : vector<8x1xf32> to vector<8x128xf32>
    %9 = arith.subf %2, %8 : vector<8x128xf32>
    %10 = arith.mulf %9, %9 : vector<8x128xf32>
    %cst_6 = arith.constant dense<0.000000e+00> : vector<8xf32>
    %11 = vector.multi_reduction <add>, %10, %cst_6 [1] : vector<8x128xf32> to vector<8xf32>
    %12 = vector.shape_cast %11 : vector<8xf32> to vector<8x1xf32>
    %cst_7 = arith.constant 7.812500e-03 : f32
    %13 = vector.broadcast %cst_7 : f32 to vector<8x1xf32>
    %14 = arith.mulf %12, %13 : vector<8x1xf32>
    %cst_8 = arith.constant 9.99999974E-6 : f32
    %15 = vector.broadcast %cst_8 : f32 to vector<8x1xf32>
    %16 = arith.addf %14, %15 : vector<8x1xf32>
    %17 = math.rsqrt %16 : vector<8x1xf32>
    %18 = vector.broadcast %17 : vector<8x1xf32> to vector<8x128xf32>
    %19 = arith.mulf %9, %18 : vector<8x128xf32>
    %c0_9 = arith.constant 0 : index
    %c0_10 = arith.constant 0 : index
    %20 = vector.load %arg3[%c0_9, %c0_10] : memref<1x128xf32, #tpu.memory_space<vmem>>, vector<1x128xf32>
    %c0_11 = arith.constant 0 : index
    %c0_12 = arith.constant 0 : index
    %21 = vector.load %arg4[%c0_11, %c0_12] : memref<1x128xf32, #tpu.memory_space<vmem>>, vector<1x128xf32>
    %c0_13 = arith.constant 0 : index
    %c0_14 = arith.constant 0 : index
    %22 = vector.load %arg5[%c0_13, %c0_14] : memref<1x128xf32, #tpu.memory_space<vmem>>, vector<1x128xf32>
    %c0_15 = arith.constant 0 : index
    %c0_16 = arith.constant 0 : index
    %23 = vector.load %arg6[%c0_15, %c0_16] : memref<1x128xf32, #tpu.memory_space<vmem>>, vector<1x128xf32>
    %24 = vector.broadcast %20 : vector<1x128xf32> to vector<8x128xf32>
    %25 = arith.mulf %19, %24 : vector<8x128xf32>
    %26 = vector.broadcast %21 : vector<1x128xf32> to vector<8x128xf32>
    %27 = arith.addf %25, %26 : vector<8x128xf32>
    %c0_17 = arith.constant 0 : index
    %c0_18 = arith.constant 0 : index
    %28 = vector.load %arg7[%c0_17, %c0_18] : memref<8x128xf32, #tpu.memory_space<vmem>>, vector<8x128xf32>
    tpu.vector_store %arg7[%c0_17, %c0_18], %27 {strides = array<i32>} : memref<8x128xf32, #tpu.memory_space<vmem>>, vector<8x128xf32>,
    %29 = vector.broadcast %22 : vector<1x128xf32> to vector<8x128xf32>
    %30 = arith.mulf %19, %29 : vector<8x128xf32>
    %31 = vector.broadcast %23 : vector<1x128xf32> to vector<8x128xf32>
    %32 = arith.addf %30, %31 : vector<8x128xf32>
    %c0_19 = arith.constant 0 : index
    %c0_20 = arith.constant 0 : index
    %33 = vector.load %arg8[%c0_19, %c0_20] : memref<8x128xf32, #tpu.memory_space<vmem>>, vector<8x128xf32>
    tpu.vector_store %arg8[%c0_19, %c0_20], %32 {strides = array<i32>} : memref<8x128xf32, #tpu.memory_space<vmem>>, vector<8x128xf32>,
    return
  }
  func.func @transform_0(%arg0: i32) -> (i32, i32) {
    %c0_i32 = arith.constant 0 : i32
    %c0_i32_0 = arith.constant 0 : i32
    return %arg0, %c0_i32 : i32, i32
  }
  func.func @transform_1(%arg0: i32) -> (i32, i32) {
    %c0_i32 = arith.constant 0 : i32
    %c0_i32_0 = arith.constant 0 : i32
    return %arg0, %c0_i32 : i32, i32
  }
  func.func @transform_2(%arg0: i32) -> (i32, i32) {
    %c0_i32 = arith.constant 0 : i32
    %c0_i32_0 = arith.constant 0 : i32
    %c0_i32_1 = arith.constant 0 : i32
    return %c0_i32, %c0_i32_0 : i32, i32
  }
  func.func @transform_3(%arg0: i32) -> (i32, i32) {
    %c0_i32 = arith.constant 0 : i32
    %c0_i32_0 = arith.constant 0 : i32
    %c0_i32_1 = arith.constant 0 : i32
    return %c0_i32, %c0_i32_0 : i32, i32
  }
  func.func @transform_4(%arg0: i32) -> (i32, i32) {
    %c0_i32 = arith.constant 0 : i32
    %c0_i32_0 = arith.constant 0 : i32
    %c0_i32_1 = arith.constant 0 : i32
    return %c0_i32, %c0_i32_0 : i32, i32
  }
  func.func @transform_5(%arg0: i32) -> (i32, i32) {
    %c0_i32 = arith.constant 0 : i32
    %c0_i32_0 = arith.constant 0 : i32
    %c0_i32_1 = arith.constant 0 : i32
    return %c0_i32, %c0_i32_0 : i32, i32
  }
  func.func @transform_6(%arg0: i32) -> (i32, i32) {
    %c0_i32 = arith.constant 0 : i32
    %c0_i32_0 = arith.constant 0 : i32
    return %arg0, %c0_i32 : i32, i32
  }
  func.func @transform_7(%arg0: i32) -> (i32, i32) {
    %c0_i32 = arith.constant 0 : i32
    %c0_i32_0 = arith.constant 0 : i32
    return %arg0, %c0_i32 : i32, i32
  }
  func.func @transform_8(%arg0: i32) -> (i32, i32) {
    %c0_i32 = arith.constant 0 : i32
    %c0_i32_0 = arith.constant 0 : i32
    return %arg0, %c0_i32 : i32, i32
  }
}

</mosaic_0001>

<llo_original>
// kernel: tpu_custom_call.1
$region0: #{tpu_custom_call.1}
  #allocation0 [shape = 'u32[]', space=smem, size = 0x4, offset = 0x4, fixed_abs, tag = 'smem constant byte address 0x4 - core index']
  #allocation1 [shape = 'u32[144,128]{1,0:T(1,128)}', space=vmem, size = 0x12000, scoped, tag = 'internal scratch']
  %s0 = inlined_call_operand.hbm [shape: f32[20,128], index: 0, kind: input, shape index: {}]
  %s1 = inlined_call_operand.hbm [shape: f32[20,128], index: 1, kind: input, shape index: {}]
  %s2 = inlined_call_operand.vmem [shape: f32[1,128], index: 2, kind: input, shape index: {}]
  %s3 = inlined_call_operand.vmem [shape: f32[1,128], index: 3, kind: input, shape index: {}]
  %s4 = inlined_call_operand.vmem [shape: f32[1,128], index: 4, kind: input, shape index: {}]
  %s5 = inlined_call_operand.vmem [shape: f32[1,128], index: 5, kind: input, shape index: {}]
  %s6 = inlined_call_operand.hbm [shape: f32[20,128], index: 6, kind: output, shape index: {0}]
  %s7 = inlined_call_operand.hbm [shape: f32[20,128], index: 7, kind: output, shape index: {1}]
  %s8 = inlined_call_operand.hbm [shape: f32[20,128], index: 8, kind: output, shape index: {2}]
  %9 = xla_tuple %s6, %s7, %s8
  %s10 = sld [smem:[#allocation0]]
  $region81: #{tpu_custom_call.1} parent=0
    _
  %s12 = ssub.s32 1, %s10
  %s13 = scalar_select 0, %s12, %s10
  $region1: #{tpu_custom_call.1} parent=0
    #allocation2 [shape = 'u8[8192]{0}', space=vmem, size = 0x2000, scoped, tag = 'input window, operand 0']
    #allocation3 [shape = 's32[2]{0}', space=sflag, size = 0x8, scoped, tag = 'scoped memory for tpu_custom_call.1']
    #allocation4 [shape = 's32[2]{0}', space=sflag, size = 0x8, scoped, tag = 'scoped memory for tpu_custom_call.1']
    #allocation5 [shape = 'u8[8192]{0}', space=vmem, size = 0x2000, scoped, tag = 'input window, operand 1']
    #allocation6 [shape = 's32[2]{0}', space=sflag, size = 0x8, scoped, tag = 'scoped memory for tpu_custom_call.1']
    #allocation7 [shape = 'u8[8192]{0}', space=vmem, size = 0x2000, scoped, tag = 'output window, operand 0']
    #allocation8 [shape = 'u8[8192]{0}', space=vmem, size = 0x2000, scoped, tag = 'output window, operand 1']
    #allocation9 [shape = 's32[2]{0}', space=sflag, size = 0x8, scoped, tag = 'scoped memory for tpu_custom_call.1']
    #allocation10 [shape = 'u8[8192]{0}', space=vmem, size = 0x2000, scoped, tag = 'output window, operand 2']
    %14 = vsyncpa [#allocation3], 0
    %s15 = scalar_lea.sflag [#allocation3], 1
    %16 = vsyncpa %s15, 0
    %17 = vsyncpa [#allocation6], 0
    %s18 = scalar_lea.sflag [#allocation6], 1
    %19 = vsyncpa %s18, 0
    %20 = vsyncpa [#allocation4], 0
    %s21 = scalar_lea.sflag [#allocation4], 1
    %22 = vsyncpa %s21, 0
    %23 = vsyncpa [#allocation9], 0
    %s24 = scalar_lea.sflag [#allocation9], 1
    %25 = vsyncpa %s24, 0
    loop: start=0, step=1, limit=5
    $region2: #{tpu_custom_call.1} parent=1 // loop_pre_header
      _
    $region3: #{tpu_custom_call.1} parent=1 // loop_header
      %s27 = sphi 0, %s31
      %p28 = scmp.ge.s32.totalorder %s27, 5
      %s37 = sphi 0, %s39
      %s40 = sphi 0, %s37
      %s41 = sphi 0, %s40
      %s57 = sphi 0, %s41
      %s63 = sphi 0, %s65
      %s66 = sphi 0, %s63
      %s67 = sphi 0, %s66
      %s83 = sphi 0, %s67
      %s87 = sphi 0, %s87
      %s89 = sphi 0, %s87
      %s90 = sphi 0, %s89
      %s104 = sphi 0, %s90
      %s108 = sphi 0, %s108
      %s110 = sphi 0, %s108
      %s111 = sphi 0, %s110
      %s125 = sphi 0, %s111
      %s129 = sphi 0, %s129
      %s131 = sphi 0, %s129
      %s132 = sphi 0, %s131
      %s146 = sphi 0, %s132
      %s150 = sphi 0, %s150
      %s152 = sphi 0, %s150
      %s153 = sphi 0, %s152
      %s167 = sphi 0, %s153
      %s173 = sphi 0, %s175
      %s176 = sphi 0, %s173
      %s177 = sphi 0, %s176
      %s193 = sphi 0, %s177
      %s199 = sphi 0, %s201
      %s202 = sphi 0, %s199
      %s203 = sphi 0, %s202
      %s219 = sphi 0, %s203
      %s225 = sphi 0, %s227
      %s228 = sphi 0, %s225
      %s229 = sphi 0, %s228
      %s245 = sphi 0, %s229
    $region4: #{tpu_custom_call.1} parent=1 // loop_header_branch
      %30 = sbr.rel (%p28) target = $region8
    $region5: #{tpu_custom_call.1} parent=1 // loop_body
      %s32 = ssub.s32 %s27, 1
      %s33 = ssub.s32 %s27, 2
      %s34 = sadd.s32 %s27, 1
      %s35 = ssub.s32 %s27, %s34
      %p36 = scmp.eq.s32.totalorder %s35, 0
      %s38 = sadd.s32 %s37, 1
      %s39 = scalar_select %p36, %s37, %s38
      %p42 = pneg %p36
      %p43 = scmp.eq.s32.totalorder %s27, 2
      %p44 = por %p42, %p43
      %p45 = scmp.ne.s32.totalorder %s37, %s40
      %p46 = scmp.eq.s32.totalorder %s27, 0
      %p47 = por %p45, %p46
      %p48 = scmp.ne.s32.totalorder %s37, %s40
      %p49 = scmp.eq.s32.totalorder %s32, 2
      %p50 = por %p48, %p49
      %p51 = scmp.ne.s32.totalorder %s40, %s41
      %p52 = scmp.eq.s32.totalorder %s32, 0
      %p53 = por %p51, %p52
      %p54 = scmp.ne.s32.totalorder %s40, %s41
      %p55 = scmp.eq.s32.totalorder %s33, 2
      %p56 = por %p54, %p55
      %p58 = scmp.ne.s32.totalorder %s41, %s57
      %p59 = scmp.eq.s32.totalorder %s33, 0
      %p60 = por %p58, %p59
      %s61 = ssub.s32 %s27, %s34
      %p62 = scmp.eq.s32.totalorder %s61, 0
      %s64 = sadd.s32 %s63, 1
      %s65 = scalar_select %p62, %s63, %s64
      %p68 = pneg %p62
      %p69 = scmp.eq.s32.totalorder %s27, 2
      %p70 = por %p68, %p69
      %p71 = scmp.ne.s32.totalorder %s63, %s66
      %p72 = scmp.eq.s32.totalorder %s27, 0
      %p73 = por %p71, %p72
      %p74 = scmp.ne.s32.totalorder %s63, %s66
      %p75 = scmp.eq.s32.totalorder %s32, 2
      %p76 = por %p74, %p75
      %p77 = scmp.ne.s32.totalorder %s66, %s67
      %p78 = scmp.eq.s32.totalorder %s32, 0
      %p79 = por %p77, %p78
      %p80 = scmp.ne.s32.totalorder %s66, %s67
      %p81 = scmp.eq.s32.totalorder %s33, 2
      %p82 = por %p80, %p81
      %p84 = scmp.ne.s32.totalorder %s67, %s83
      %p85 = scmp.eq.s32.totalorder %s33, 0
      %p86 = por %p84, %p85
      %s88 = sadd.s32 %s87, 1
      %p91 = scmp.eq.s32.totalorder %s27, 2
      %p92 = scmp.ne.s32.totalorder %s87, %s89
      %p93 = scmp.eq.s32.totalorder %s27, 0
      %p94 = por %p92, %p93
      %p95 = scmp.ne.s32.totalorder %s87, %s89
      %p96 = scmp.eq.s32.totalorder %s32, 2
      %p97 = por %p95, %p96
      %p98 = scmp.ne.s32.totalorder %s89, %s90
      %p99 = scmp.eq.s32.totalorder %s32, 0
      %p100 = por %p98, %p99
      %p101 = scmp.ne.s32.totalorder %s89, %s90
      %p102 = scmp.eq.s32.totalorder %s33, 2
      %p103 = por %p101, %p102
      %p105 = scmp.ne.s32.totalorder %s90, %s104
      %p106 = scmp.eq.s32.totalorder %s33, 0
      %p107 = por %p105, %p106
      %s109 = sadd.s32 %s108, 1
      %p112 = scmp.eq.s32.totalorder %s27, 2
      %p113 = scmp.ne.s32.totalorder %s108, %s110
      %p114 = scmp.eq.s32.totalorder %s27, 0
      %p115 = por %p113, %p114
      %p116 = scmp.ne.s32.totalorder %s108, %s110
      %p117 = scmp.eq.s32.totalorder %s32, 2
      %p118 = por %p116, %p117
      %p119 = scmp.ne.s32.totalorder %s110, %s111
      %p120 = scmp.eq.s32.totalorder %s32, 0
      %p121 = por %p119, %p120
      %p122 = scmp.ne.s32.totalorder %s110, %s111
      %p123 = scmp.eq.s32.totalorder %s33, 2
      %p124 = por %p122, %p123
      %p126 = scmp.ne.s32.totalorder %s111, %s125
      %p127 = scmp.eq.s32.totalorder %s33, 0
      %p128 = por %p126, %p127
      %s130 = sadd.s32 %s129, 1
      %p133 = scmp.eq.s32.totalorder %s27, 2
      %p134 = scmp.ne.s32.totalorder %s129, %s131
      %p135 = scmp.eq.s32.totalorder %s27, 0
      %p136 = por %p134, %p135
      %p137 = scmp.ne.s32.totalorder %s129, %s131
      %p138 = scmp.eq.s32.totalorder %s32, 2
      %p139 = por %p137, %p138
      %p140 = scmp.ne.s32.totalorder %s131, %s132
      %p141 = scmp.eq.s32.totalorder %s32, 0
      %p142 = por %p140, %p141
      %p143 = scmp.ne.s32.totalorder %s131, %s132
      %p144 = scmp.eq.s32.totalorder %s33, 2
      %p145 = por %p143, %p144
      %p147 = scmp.ne.s32.totalorder %s132, %s146
      %p148 = scmp.eq.s32.totalorder %s33, 0
      %p149 = por %p147, %p148
      %s151 = sadd.s32 %s150, 1
      %p154 = scmp.eq.s32.totalorder %s27, 2
      %p155 = scmp.ne.s32.totalorder %s150, %s152
      %p156 = scmp.eq.s32.totalorder %s27, 0
      %p157 = por %p155, %p156
      %p158 = scmp.ne.s32.totalorder %s150, %s152
      %p159 = scmp.eq.s32.totalorder %s32, 2
      %p160 = por %p158, %p159
      %p161 = scmp.ne.s32.totalorder %s152, %s153
      %p162 = scmp.eq.s32.totalorder %s32, 0
      %p163 = por %p161, %p162
      %p164 = scmp.ne.s32.totalorder %s152, %s153
      %p165 = scmp.eq.s32.totalorder %s33, 2
      %p166 = por %p164, %p165
      %p168 = scmp.ne.s32.totalorder %s153, %s167
      %p169 = scmp.eq.s32.totalorder %s33, 0
      %p170 = por %p168, %p169
      %s171 = ssub.s32 %s27, %s34
      %p172 = scmp.eq.s32.totalorder %s171, 0
      %s174 = sadd.s32 %s173, 1
      %s175 = scalar_select %p172, %s173, %s174
      %p178 = pneg %p172
      %p179 = scmp.eq.s32.totalorder %s27, 2
      %p180 = por %p178, %p179
      %p181 = scmp.ne.s32.totalorder %s173, %s176
      %p182 = scmp.eq.s32.totalorder %s27, 0
      %p183 = por %p181, %p182
      %p184 = scmp.ne.s32.totalorder %s173, %s176
      %p185 = scmp.eq.s32.totalorder %s32, 2
      %p186 = por %p184, %p185
      %p187 = scmp.ne.s32.totalorder %s176, %s177
      %p188 = scmp.eq.s32.totalorder %s32, 0
      %p189 = por %p187, %p188
      %p190 = scmp.ne.s32.totalorder %s176, %s177
      %p191 = scmp.eq.s32.totalorder %s33, 2
      %p192 = por %p190, %p191
      %p194 = scmp.ne.s32.totalorder %s177, %s193
      %p195 = scmp.eq.s32.totalorder %s33, 0
      %p196 = por %p194, %p195
      %s197 = ssub.s32 %s27, %s34
      %p198 = scmp.eq.s32.totalorder %s197, 0
      %s200 = sadd.s32 %s199, 1
      %s201 = scalar_select %p198, %s199, %s200
      %p204 = pneg %p198
      %p205 = scmp.eq.s32.totalorder %s27, 2
      %p206 = por %p204, %p205
      %p207 = scmp.ne.s32.totalorder %s199, %s202
      %p208 = scmp.eq.s32.totalorder %s27, 0
      %p209 = por %p207, %p208
      %p210 = scmp.ne.s32.totalorder %s199, %s202
      %p211 = scmp.eq.s32.totalorder %s32, 2
      %p212 = por %p210, %p211
      %p213 = scmp.ne.s32.totalorder %s202, %s203
      %p214 = scmp.eq.s32.totalorder %s32, 0
      %p215 = por %p213, %p214
      %p216 = scmp.ne.s32.totalorder %s202, %s203
      %p217 = scmp.eq.s32.totalorder %s33, 2
      %p218 = por %p216, %p217
      %p220 = scmp.ne.s32.totalorder %s203, %s219
      %p221 = scmp.eq.s32.totalorder %s33, 0
      %p222 = por %p220, %p221
      %s223 = ssub.s32 %s27, %s34
      %p224 = scmp.eq.s32.totalorder %s223, 0
      %s226 = sadd.s32 %s225, 1
      %s227 = scalar_select %p224, %s225, %s226
      %p230 = pneg %p224
      %p231 = scmp.eq.s32.totalorder %s27, 2
      %p232 = por %p230, %p231
      %p233 = scmp.ne.s32.totalorder %s225, %s228
      %p234 = scmp.eq.s32.totalorder %s27, 0
      %p235 = por %p233, %p234
      %p236 = scmp.ne.s32.totalorder %s225, %s228
      %p237 = scmp.eq.s32.totalorder %s32, 2
      %p238 = por %p236, %p237
      %p239 = scmp.ne.s32.totalorder %s228, %s229
      %p240 = scmp.eq.s32.totalorder %s32, 0
      %p241 = por %p239, %p240
      %p242 = scmp.ne.s32.totalorder %s228, %s229
      %p243 = scmp.eq.s32.totalorder %s33, 2
      %p244 = por %p242, %p243
      %p246 = scmp.ne.s32.totalorder %s229, %s245
      %p247 = scmp.eq.s32.totalorder %s33, 0
      %p248 = por %p246, %p247
      %p249 = scmp.le.s32.totalorder 1, %s27
      %p250 = scmp.lt.s32.totalorder %s27, 4
      %p251 = pnand %p249, %p250
      %p252 = pneg %p251
      // Predicated region
      $region9: #{tpu_custom_call.1} parent=5 // pred_check
        _
      $region10: #{tpu_custom_call.1} parent=5 // pred_check_branch
        %254 = sbr.rel (%p251) target = $region12
      $region11: #{tpu_custom_call.1} parent=5 // pred_region
        %s255 = ssub.s32 %s27, 1
        // Predicated region
        $region13: #{tpu_custom_call.1} parent=11 // pred_check
          %p256 = pneg %p100
        $region14: #{tpu_custom_call.1} parent=11 // pred_check_branch
          %258 = sbr.rel (%p256) target = $region16
        $region15: #{tpu_custom_call.1} parent=11 // pred_region
          _
        $region16: #{tpu_custom_call.1} parent=11 // pred_fallthru
          _
        // Predicated region
        $region17: #{tpu_custom_call.1} parent=11 // pred_check
          %p259 = pneg %p121
        $region18: #{tpu_custom_call.1} parent=11 // pred_check_branch
          %261 = sbr.rel (%p259) target = $region20
        $region19: #{tpu_custom_call.1} parent=11 // pred_region
          _
        $region20: #{tpu_custom_call.1} parent=11 // pred_fallthru
          _
        // Predicated region
        $region21: #{tpu_custom_call.1} parent=11 // pred_check
          %p262 = pneg %p142
        $region22: #{tpu_custom_call.1} parent=11 // pred_check_branch
          %264 = sbr.rel (%p262) target = $region24
        $region23: #{tpu_custom_call.1} parent=11 // pred_region
          _
        $region24: #{tpu_custom_call.1} parent=11 // pred_fallthru
          _
        // Predicated region
        $region25: #{tpu_custom_call.1} parent=11 // pred_check
          %p265 = pneg %p163
        $region26: #{tpu_custom_call.1} parent=11 // pred_check_branch
          %267 = sbr.rel (%p265) target = $region28
        $region27: #{tpu_custom_call.1} parent=11 // pred_region
          _
        $region28: #{tpu_custom_call.1} parent=11 // pred_fallthru
          _
      $region12: #{tpu_custom_call.1} parent=5 // pred_fallthru
        _
      %p268 = scmp.lt.s32.totalorder %s27, 3
      // Predicated region
      $region29: #{tpu_custom_call.1} parent=5 // pred_check
        %p269 = pneg %p268
      $region30: #{tpu_custom_call.1} parent=5 // pred_check_branch
        %271 = sbr.rel (%p269) target = $region32
      $region31: #{tpu_custom_call.1} parent=5 // pred_region
        // Predicated region
        $region33: #{tpu_custom_call.1} parent=31 // pred_check
          %p272 = pneg %p47
        $region34: #{tpu_custom_call.1} parent=31 // pred_check_branch
          %274 = sbr.rel (%p272) target = $region36
        $region35: #{tpu_custom_call.1} parent=31 // pred_region
          %s275 = sand.u32 %s37, 1
          %s276 = scalar_lea.sflag [#allocation3], %s275
          %s277 = sand.u32 %s37, 1
          %s278 = smul.addr %s277, 8
          %s279 = scalar_lea.vmem [#allocation2], %s278
          %s281 = ssub.s32 128, 128
          %282 = vsyncadd %s276, %s281
          %s283 = smul.addr %s27, 128
          %s284 = scalar_lea.hbm %s0, %s283
          %s286 = sshll.u32 %s279, 4
          %s287 = int_to_ptr.vmem [resolvable:$true] %s286
          %289 = dma.hbm_to_vmem [thread:$0]  %s284, 128, %s287, %s276
        $region36: #{tpu_custom_call.1} parent=31 // pred_fallthru
          _
        // Predicated region
        $region37: #{tpu_custom_call.1} parent=31 // pred_check
          %p290 = pneg %p73
        $region38: #{tpu_custom_call.1} parent=31 // pred_check_branch
          %292 = sbr.rel (%p290) target = $region40
        $region39: #{tpu_custom_call.1} parent=31 // pred_region
          %s293 = sand.u32 %s63, 1
          %s294 = scalar_lea.sflag [#allocation6], %s293
          %s295 = sand.u32 %s63, 1
          %s296 = smul.addr %s295, 8
          %s297 = scalar_lea.vmem [#allocation5], %s296
          %s299 = ssub.s32 128, 128
          %300 = vsyncadd %s294, %s299
          %s301 = smul.addr %s27, 128
          %s302 = scalar_lea.hbm %s1, %s301
          %s304 = sshll.u32 %s297, 4
          %s305 = int_to_ptr.vmem [resolvable:$true] %s304
          %307 = dma.hbm_to_vmem [thread:$0]  %s302, 128, %s305, %s294
        $region40: #{tpu_custom_call.1} parent=31 // pred_fallthru
          _
      $region32: #{tpu_custom_call.1} parent=5 // pred_fallthru
        _
      %p308 = scmp.le.s32.totalorder 1, %s27
      %p309 = scmp.lt.s32.totalorder %s27, 4
      %p310 = pnand %p308, %p309
      %p311 = pneg %p310
      // Predicated region
      $region41: #{tpu_custom_call.1} parent=5 // pred_check
        _
      $region42: #{tpu_custom_call.1} parent=5 // pred_check_branch
        %313 = sbr.rel (%p310) target = $region44
      $region43: #{tpu_custom_call.1} parent=5 // pred_region
        %s314 = ssub.s32 %s27, 1
        %s315 = sand.u32 %s40, 1
        %s316 = scalar_lea.sflag [#allocation3], %s315
        %s317 = sand.u32 %s40, 1
        %s318 = smul.addr %s317, 8
        %s319 = scalar_lea.vmem [#allocation2], %s318
        // Predicated region
        $region45: #{tpu_custom_call.1} parent=43 // pred_check
          %p320 = pneg %p53
        $region46: #{tpu_custom_call.1} parent=43 // pred_check_branch
          %322 = sbr.rel (%p320) target = $region48
        $region47: #{tpu_custom_call.1} parent=43 // pred_region
          %323 = dma.done %s316, 128
        $region48: #{tpu_custom_call.1} parent=43 // pred_fallthru
          _
        %s324 = sand.u32 %s66, 1
        %s325 = scalar_lea.sflag [#allocation6], %s324
        %s326 = sand.u32 %s66, 1
        %s327 = smul.addr %s326, 8
        %s328 = scalar_lea.vmem [#allocation5], %s327
        // Predicated region
        $region49: #{tpu_custom_call.1} parent=43 // pred_check
          %p329 = pneg %p79
        $region50: #{tpu_custom_call.1} parent=43 // pred_check_branch
          %331 = sbr.rel (%p329) target = $region52
        $region51: #{tpu_custom_call.1} parent=43 // pred_region
          %332 = dma.done %s325, 128
        $region52: #{tpu_custom_call.1} parent=43 // pred_fallthru
          _
        %s333 = sand.u32 %s40, 1
        %s334 = scalar_lea.sflag [#allocation3], %s333
        %s335 = sand.u32 %s40, 1
        %s336 = smul.addr %s335, 8
        %s337 = scalar_lea.vmem [#allocation2], %s336
        %p338 = pneg %p53
        %p339 = pneg %p50
        %s340 = sand.u32 %s66, 1
        %s341 = scalar_lea.sflag [#allocation6], %s340
        %s342 = sand.u32 %s66, 1
        %s343 = smul.addr %s342, 8
        %s344 = scalar_lea.vmem [#allocation5], %s343
        %p345 = pneg %p79
        %p346 = pneg %p76
        %p347 = pneg %p100
        %p348 = pneg %p97
        %p349 = pneg %p121
        %p350 = pneg %p118
        %p351 = pneg %p142
        %p352 = pneg %p139
        %p353 = pneg %p163
        %p354 = pneg %p160
        %p355 = pneg %p189
        %p356 = pneg %p186
        %s357 = sand.u32 %s176, 1
        %s358 = scalar_lea.sflag [#allocation4], %s357
        %s359 = sand.u32 %s176, 1
        %s360 = smul.addr %s359, 8
        %s361 = scalar_lea.vmem [#allocation7], %s360
        %p362 = pneg %p215
        %p363 = pneg %p212
        %s364 = sand.u32 %s32, 1
        %s365 = scalar_lea.sflag [#allocation9], %s364
        %s366 = sand.u32 %s202, 1
        %s367 = smul.addr %s366, 8
        %s368 = scalar_lea.vmem [#allocation8], %s367
        %p369 = pneg %p241
        %p370 = pneg %p238
        %s371 = sand.u32 %s32, 1
        %s372 = scalar_lea.sflag [#allocation9], %s371
        %s373 = sand.u32 %s228, 1
        %s374 = smul.addr %s373, 8
        %s375 = scalar_lea.vmem [#allocation10], %s374
        %v376 = vld [vmem:[%s319] sm:$0xff]
        %v377 = vld [vmem:[%s328] sm:$0xff]
        %v378 = vadd.f32 %v376, %v377
        %379 = vst [vmem:[%s375] sm:$0xff] %v378
        %380 = vadd.xlane.f32.xlu0 %v378
        %v381 = vpop.xlane.xlu0 %380
        %v382 = vmul.f32 %v381, 0.0078125
        %v383 = vsub.f32 %v378, %v382
        %v384 = vmul.f32 %v383, %v383
        %385 = vadd.xlane.f32.xlu0 %v384
        %v386 = vpop.xlane.xlu0 %385
        %v387 = vmul.f32 %v386, 0.0078125
        %v388 = vadd.f32 %v387, 1e-05
        %v389 = vrsqrt.pop %v388
        %v390 = vmul.f32 %v383, %v389
        %v391 = vld [vmem:[%s2] sm:$0x1]
        %v392 = vld [vmem:[%s3] sm:$0x1]
        %v393 = vld [vmem:[%s4] sm:$0x1]
        %v394 = vld [vmem:[%s5] sm:$0x1]
        %v396 = vlaneseq
        %v397 = vshrl.u32 %v396, 7
        %v398 = vsub.s32 0, %v397
        %v399 = vrot.slane %v391, %v398
        %v401 = vmul.f32 %v390, %v399
        %v403 = vlaneseq
        %v404 = vshrl.u32 %v403, 7
        %v405 = vsub.s32 0, %v404
        %v406 = vrot.slane %v392, %v405
        %v408 = vadd.f32 %v401, %v406
        %409 = vst [vmem:[%s361] sm:$0xff] %v408
        %v411 = vlaneseq
        %v412 = vshrl.u32 %v411, 7
        %v413 = vsub.s32 0, %v412
        %v414 = vrot.slane %v393, %v413
        %v416 = vmul.f32 %v390, %v414
        %v418 = vlaneseq
        %v419 = vshrl.u32 %v418, 7
        %v420 = vsub.s32 0, %v419
        %v421 = vrot.slane %v394, %v420
        %v423 = vadd.f32 %v416, %v421
        %424 = vst [vmem:[%s368] sm:$0xff] %v423
        %s425 = sand.u32 %s176, 1
        %s426 = scalar_lea.sflag [#allocation4], %s425
        %s427 = sand.u32 %s176, 1
        %s428 = smul.addr %s427, 8
        %s429 = scalar_lea.vmem [#allocation7], %s428
        %s430 = sand.u32 %s32, 1
        %s431 = scalar_lea.sflag [#allocation9], %s430
        %s432 = sand.u32 %s202, 1
        %s433 = smul.addr %s432, 8
        %s434 = scalar_lea.vmem [#allocation8], %s433
        %s435 = sand.u32 %s32, 1
        %s436 = scalar_lea.sflag [#allocation9], %s435
        %s437 = sand.u32 %s228, 1
        %s438 = smul.addr %s437, 8
        %s439 = scalar_lea.vmem [#allocation10], %s438
        // Predicated region
        $region53: #{tpu_custom_call.1} parent=43 // pred_check
          %p440 = pneg %p186
        $region54: #{tpu_custom_call.1} parent=43 // pred_check_branch
          %442 = sbr.rel (%p440) target = $region56
        $region55: #{tpu_custom_call.1} parent=43 // pred_region
          %s444 = ssub.s32 128, 128
          %445 = vsyncadd %s426, %s444
          %s446 = smul.addr %s32, 128
          %s447 = scalar_lea.hbm %s6, %s446
          %s449 = sshll.u32 %s429, 4
          %s450 = int_to_ptr.vmem [resolvable:$true] %s449
          %452 = dma.vmem_to_hbm [thread:$0]  %s450, 128, %s447, %s426
        $region56: #{tpu_custom_call.1} parent=43 // pred_fallthru
          _
        // Predicated region
        $region57: #{tpu_custom_call.1} parent=43 // pred_check
          %p453 = pneg %p212
        $region58: #{tpu_custom_call.1} parent=43 // pred_check_branch
          %455 = sbr.rel (%p453) target = $region60
        $region59: #{tpu_custom_call.1} parent=43 // pred_region
          %s457 = ssub.s32 128, 128
          %458 = vsyncadd %s431, %s457
          %s459 = smul.addr %s32, 128
          %s460 = scalar_lea.hbm %s7, %s459
          %s462 = sshll.u32 %s434, 4
          %s463 = int_to_ptr.vmem [resolvable:$true] %s462
          %465 = dma.vmem_to_hbm [thread:$0]  %s463, 128, %s460, %s431
        $region60: #{tpu_custom_call.1} parent=43 // pred_fallthru
          _
        // Predicated region
        $region61: #{tpu_custom_call.1} parent=43 // pred_check
          %p466 = pneg %p238
        $region62: #{tpu_custom_call.1} parent=43 // pred_check_branch
          %468 = sbr.rel (%p466) target = $region64
        $region63: #{tpu_custom_call.1} parent=43 // pred_region
          %s470 = ssub.s32 128, 128
          %471 = vsyncadd %s436, %s470
          %s472 = smul.addr %s32, 128
          %s473 = scalar_lea.hbm %s8, %s472
          %s475 = sshll.u32 %s439, 4
          %s476 = int_to_ptr.vmem [resolvable:$true] %s475
          %478 = dma.vmem_to_hbm [thread:$0]  %s476, 128, %s473, %s436
        $region64: #{tpu_custom_call.1} parent=43 // pred_fallthru
          _
      $region44: #{tpu_custom_call.1} parent=5 // pred_fallthru
        _
      %p479 = scmp.le.s32.totalorder 2, %s27
      // Predicated region
      $region65: #{tpu_custom_call.1} parent=5 // pred_check
        %p480 = pneg %p479
      $region66: #{tpu_custom_call.1} parent=5 // pred_check_branch
        %482 = sbr.rel (%p480) target = $region68
      $region67: #{tpu_custom_call.1} parent=5 // pred_region
        %s483 = ssub.s32 %s27, 2
        // Predicated region
        $region69: #{tpu_custom_call.1} parent=67 // pred_check
          %p484 = pneg %p192
        $region70: #{tpu_custom_call.1} parent=67 // pred_check_branch
          %486 = sbr.rel (%p484) target = $region72
        $region71: #{tpu_custom_call.1} parent=67 // pred_region
          %s487 = sand.u32 %s177, 1
          %s488 = scalar_lea.sflag [#allocation4], %s487
          %s489 = sand.u32 %s177, 1
          %s490 = smul.addr %s489, 8
          %s491 = scalar_lea.vmem [#allocation7], %s490
          %492 = dma.done %s488, 128
        $region72: #{tpu_custom_call.1} parent=67 // pred_fallthru
          _
        // Predicated region
        $region73: #{tpu_custom_call.1} parent=67 // pred_check
          %p493 = pneg %p218
        $region74: #{tpu_custom_call.1} parent=67 // pred_check_branch
          %495 = sbr.rel (%p493) target = $region76
        $region75: #{tpu_custom_call.1} parent=67 // pred_region
          %s496 = sand.u32 %s33, 1
          %s497 = scalar_lea.sflag [#allocation9], %s496
          %s498 = sand.u32 %s203, 1
          %s499 = smul.addr %s498, 8
          %s500 = scalar_lea.vmem [#allocation8], %s499
          %501 = dma.done %s497, 128
        $region76: #{tpu_custom_call.1} parent=67 // pred_fallthru
          _
        // Predicated region
        $region77: #{tpu_custom_call.1} parent=67 // pred_check
          %p502 = pneg %p244
        $region78: #{tpu_custom_call.1} parent=67 // pred_check_branch
          %504 = sbr.rel (%p502) target = $region80
        $region79: #{tpu_custom_call.1} parent=67 // pred_region
          %s505 = sand.u32 %s33, 1
          %s506 = scalar_lea.sflag [#allocation9], %s505
          %s507 = sand.u32 %s229, 1
          %s508 = smul.addr %s507, 8
          %s509 = scalar_lea.vmem [#allocation10], %s508
          %510 = dma.done %s506, 128
        $region80: #{tpu_custom_call.1} parent=67 // pred_fallthru
          _
      $region68: #{tpu_custom_call.1} parent=5 // pred_fallthru
        _
    $region6: #{tpu_custom_call.1} parent=1 // loop_footer
      %s31 = sadd.s32 1, %s27
    $region7: #{tpu_custom_call.1} parent=1 // loop_footer_branch
      %26 = sbr.rel target = $region3
    $region8: #{tpu_custom_call.1} parent=1 // loop_exit
      _
    %511 = vsyncpa [#allocation3], 1
    %s512 = scalar_lea.sflag [#allocation3], 1
    %513 = vsyncpa %s512, 1
    %514 = vsyncpa [#allocation6], 1
    %s515 = scalar_lea.sflag [#allocation6], 1
    %516 = vsyncpa %s515, 1
    %517 = vsyncpa [#allocation4], 1
    %s518 = scalar_lea.sflag [#allocation4], 1
    %519 = vsyncpa %s518, 1
    %520 = vsyncpa [#allocation9], 1
    %s521 = scalar_lea.sflag [#allocation9], 1
    %522 = vsyncpa %s521, 1

</llo_original>
